<compile_context>
chip_gen: v5e
topology: v5e:2x2
jax: 0.10.0
libtpu: 0.0.40
codegen_flags: <defaults>
</compile_context>

<pallas_src>
import functools

import jax
import jax.numpy as jnp
from jax.experimental import pallas as pl
from jax.experimental.pallas import tpu as pltpu


def _round_up(x, m):
    return ((x + m - 1) // m) * m


def benson_mlp_kernel(x_ref, w1_ref, b1_ref, w2_ref, b2_ref, o_ref):
    # Layer 1: Linear (+bias) + ReLU.  MXU accumulates in f32; bias-add / ReLU
    # run on the VPU in f32 (rides in spare VALU slots under the MXU).
    h = jnp.dot(x_ref[...], w1_ref[...], preferred_element_type=jnp.float32)
    h = jnp.maximum(h + b1_ref[...], 0.0)          # b1 is (1, H1) f32, broadcasts

    # Layer 2: cast activations to the weight dtype (bf16 path hits the bf16
    # MXU rate), accumulate in f32, f32 epilogue, cast on store.
    h = h.astype(w2_ref.dtype)
    o = jnp.dot(h, w2_ref[...], preferred_element_type=jnp.float32)
    o = jnp.maximum(o + b2_ref[...], 0.0)          # b2 is (1, H2) f32
    o_ref[...] = o.astype(o_ref.dtype)


@functools.partial(jax.jit, static_argnames=("block_b",))
def benson_mlp(x, w1, b1, w2, b2, *, block_b=4096):
    """Fused two-layer MLP forward.  x: [B, D_in], w: [in, out], b: [out]."""
    B, D_in = x.shape
    H1 = w1.shape[1]
    H2 = w2.shape[1]
    assert w1.shape == (D_in, H1)
    assert w2.shape == (H1, H2)

    # Biases stay f32 (f32 epilogue regardless of operand dtype).
    b1 = b1.astype(jnp.float32).reshape(1, H1)
    b2 = b2.astype(jnp.float32).reshape(1, H2)

    # --- batch tiling ---------------------------------------------------------
    # Number of grid steps: at least cdiv(B, block_b); force >= 2 steps when the
    # batch is big enough so the "parallel" axis can split across v7x's 2 TCs.
    n_steps = pl.cdiv(B, block_b)
    if B >= 32:
        n_steps = max(n_steps, 2)
    # Tile: multiple of 16 (bf16 sublane packing; satisfies the (8,128) rule).
    tb = _round_up(pl.cdiv(B, n_steps), 16)
    B_pad = _round_up(B, tb)
    if B_pad != B:
        # NOTE: padded rows produce garbage (nonzero) outputs; they are sliced
        # off below — do not reuse the padded buffer.
        x = jnp.pad(x, ((0, B_pad - B), (0, 0)))
    grid = (B_pad // tb,)

    itemsize = lambda a: a.size * a.dtype.itemsize
    out_bytes = B_pad * H2 * x.dtype.itemsize
    cost = pl.CostEstimate(
        flops=2 * B_pad * (D_in * H1 + H1 * H2),
        transcendentals=0,
        bytes_accessed=(itemsize(x) + itemsize(w1) + itemsize(b1)
                        + itemsize(w2) + itemsize(b2) + out_bytes),
    )

    out = pl.pallas_call(
        benson_mlp_kernel,
        out_shape=jax.ShapeDtypeStruct((B_pad, H2), x.dtype),
        grid=grid,
        in_specs=[
            pl.BlockSpec((tb, D_in), lambda i: (i, 0)),     # streamed per tile
            pl.BlockSpec((D_in, H1), lambda i: (0, 0)),     # resident weights
            pl.BlockSpec((1, H1), lambda i: (0, 0)),        # resident bias
            pl.BlockSpec((H1, H2), lambda i: (0, 0)),       # resident weights
            pl.BlockSpec((1, H2), lambda i: (0, 0)),        # resident bias
        ],
        # Unpadded output: block last dim == full array dim (legal even if <128).
        # Masked vst, but half the HBM writeback and no post-kernel column slice.
        out_specs=pl.BlockSpec((tb, H2), lambda i: (i, 0)),
        compiler_params=pltpu.CompilerParams(
            dimension_semantics=("parallel",)),             # 2 TCs on v7x
        cost_estimate=cost,
    )(x, w1, b1, w2, b2)

    # Strip batch padding (if any) outside the kernel.
    if B_pad != B:
        out = out[:B]
    return out


def init_linear_params(key, fan_in, fan_out, dtype=jnp.float32):
    """nn.Linear default init: U(-1/sqrt(fan_in), 1/sqrt(fan_in))."""
    kw, kb = jax.random.split(key)
    bound = 1.0 / jnp.sqrt(jnp.array(fan_in, jnp.float32))
    w = jax.random.uniform(kw, (fan_in, fan_out), jnp.float32, -bound, bound)
    b = jax.random.uniform(kb, (fan_out,), jnp.float32, -bound, bound)
    return w.astype(dtype), b.astype(jnp.float32)


def reference_mlp(x, w1, b1, w2, b2):
    x, w1, w2 = (a.astype(jnp.float32) for a in (x, w1, w2))
    h = jnp.maximum(x @ w1 + b1, 0.0)
    return jnp.maximum(h @ w2 + b2, 0.0)


if __name__ == "__main__":
    key = jax.random.PRNGKey(0)
    k_x, k_l1, k_l2 = jax.random.split(key, 3)

    # Shapes from the module defaults: input_dim=32, hidden_dims=(128, 64).
    D_in, H1, H2 = 32, 128, 64

    # ---- Test 1: small f32 batch (single grid tile), tight tolerance --------
    B = 8
    x = jax.random.normal(k_x, (B, D_in), jnp.float32)
    w1, b1 = init_linear_params(k_l1, D_in, H1)
    w2, b2 = init_linear_params(k_l2, H1, H2)

    out = jax.block_until_ready(benson_mlp(x, w1, b1, w2, b2))
    ref = reference_mlp(x, w1, b1, w2, b2)
    assert out.shape == (B, H2)
    assert jnp.allclose(out, ref, atol=1e-5, rtol=1e-5), "f32 mismatch vs reference"

    # ---- Test 2: tiled batch in bf16 (exercises pipeline + parallel split) ---
    B2 = 512
    x2 = jax.random.normal(k_x, (B2, D_in), jnp.float32)
    x2_bf = x2.astype(jnp.bfloat16)
    w1_bf, w2_bf = w1.astype(jnp.bfloat16), w2.astype(jnp.bfloat16)

    out2 = jax.block_until_ready(benson_mlp(x2_bf, w1_bf, b1, w2_bf, b2))
    ref2 = reference_mlp(x2_bf, w1_bf, b1, w2_bf, b2)
    assert out2.shape == (B2, H2)
    assert jnp.allclose(out2.astype(jnp.float32), ref2, atol=3e-2, rtol=3e-2), \
        "bf16 mismatch vs reference"

    # ---- Test 3: ragged batch (padding path) in f32 --------------------------
    B3 = 1000
    x3 = jax.random.normal(k_x, (B3, D_in), jnp.float32)
    out3 = jax.block_until_ready(benson_mlp(x3, w1, b1, w2, b2))
    ref3 = reference_mlp(x3, w1, b1, w2, b2)
    assert out3.shape == (B3, H2)
    assert jnp.allclose(out3, ref3, atol=1e-5, rtol=1e-5), "padded-batch mismatch"

    print("KERNEL_OK")
</pallas_src>

<mosaic_0001>
module attributes {stable_mosaic.version = 11 : i64} {
  func.func @benson_mlp_kernel(%arg0: i32, %arg1: memref<16x32xf32, #tpu.memory_space<vmem>>, %arg2: memref<32x128xf32, #tpu.memory_space<vmem>>, %arg3: memref<1x128xf32, #tpu.memory_space<vmem>>, %arg4: memref<128x64xf32, #tpu.memory_space<vmem>>, %arg5: memref<1x64xf32, #tpu.memory_space<vmem>>, %arg6: memref<16x64xf32, #tpu.memory_space<vmem>>) attributes {dimension_semantics = [#tpu.dimension_semantics<parallel>], iteration_bounds = array<i64: 1>, scalar_prefetch = 0 : i64, scratch_operands = 0 : i64, tpu.core_type = #tpu.core_type<tc>, window_params = [{transform_indices = @transform_0, window_bounds = array<i64: 16, 32>}, {pipeline_mode = #tpu.pipeline_mode<synchronous>, transform_indices = @transform_1, window_bounds = array<i64: 32, 128>}, {pipeline_mode = #tpu.pipeline_mode<synchronous>, transform_indices = @transform_2, window_bounds = array<i64: 1, 128>}, {pipeline_mode = #tpu.pipeline_mode<synchronous>, transform_indices = @transform_3, window_bounds = array<i64: 128, 64>}, {pipeline_mode = #tpu.pipeline_mode<synchronous>, transform_indices = @transform_4, window_bounds = array<i64: 1, 64>}, {transform_indices = @transform_5, window_bounds = array<i64: 16, 64>}]} {
    %c0 = arith.constant 0 : index
    %c0_0 = arith.constant 0 : index
    %0 = vector.load %arg1[%c0, %c0_0] : memref<16x32xf32, #tpu.memory_space<vmem>>, vector<16x32xf32>
    %c0_1 = arith.constant 0 : index
    %c0_2 = arith.constant 0 : index
    %1 = vector.load %arg2[%c0_1, %c0_2] : memref<32x128xf32, #tpu.memory_space<vmem>>, vector<32x128xf32>
    %cst = arith.constant dense<0.000000e+00> : vector<16x128xf32>
    %2 = tpu.matmul %0, %1, %cst {dimension_numbers = #tpu.dot_dimension_numbers<[1], [0], [0], [1], [0, 0, 1, 1], [], []>} : vector<16x32xf32>, vector<32x128xf32>, vector<16x128xf32> -> vector<16x128xf32>
    %c0_3 = arith.constant 0 : index
    %c0_4 = arith.constant 0 : index
    %3 = vector.load %arg3[%c0_3, %c0_4] : memref<1x128xf32, #tpu.memory_space<vmem>>, vector<1x128xf32>
    %4 = vector.broadcast %3 : vector<1x128xf32> to vector<16x128xf32>
    %5 = arith.addf %2, %4 : vector<16x128xf32>
    %cst_5 = arith.constant 0.000000e+00 : f32
    %6 = vector.broadcast %cst_5 : f32 to vector<16x128xf32>
    %7 = arith.maximumf %5, %6 : vector<16x128xf32>
    %c0_6 = arith.constant 0 : index
    %c0_7 = arith.constant 0 : index
    %8 = vector.load %arg4[%c0_6, %c0_7] : memref<128x64xf32, #tpu.memory_space<vmem>>, vector<128x64xf32>
    %cst_8 = arith.constant dense<0.000000e+00> : vector<16x64xf32>
    %9 = tpu.matmul %7, %8, %cst_8 {dimension_numbers = #tpu.dot_dimension_numbers<[1], [0], [0], [1], [0, 0, 1, 1], [], []>} : vector<16x128xf32>, vector<128x64xf32>, vector<16x64xf32> -> vector<16x64xf32>
    %c0_9 = arith.constant 0 : index
    %c0_10 = arith.constant 0 : index
    %10 = vector.load %arg5[%c0_9, %c0_10] : memref<1x64xf32, #tpu.memory_space<vmem>>, vector<1x64xf32>
    %11 = vector.broadcast %10 : vector<1x64xf32> to vector<16x64xf32>
    %12 = arith.addf %9, %11 : vector<16x64xf32>
    %cst_11 = arith.constant 0.000000e+00 : f32
    %13 = vector.broadcast %cst_11 : f32 to vector<16x64xf32>
    %14 = arith.maximumf %12, %13 : vector<16x64xf32>
    %c0_12 = arith.constant 0 : index
    %c0_13 = arith.constant 0 : index
    %15 = vector.load %arg6[%c0_12, %c0_13] : memref<16x64xf32, #tpu.memory_space<vmem>>, vector<16x64xf32>
    tpu.vector_store %arg6[%c0_12, %c0_13], %14 {strides = array<i32>} : memref<16x64xf32, #tpu.memory_space<vmem>>, vector<16x64xf32>,
    return
  }
  func.func @transform_0(%arg0: i32) -> (i32, i32) {
    %c0_i32 = arith.constant 0 : i32
    %c0_i32_0 = arith.constant 0 : i32
    return %arg0, %c0_i32 : i32, i32
  }
  func.func @transform_1(%arg0: i32) -> (i32, i32) {
    %c0_i32 = arith.constant 0 : i32
    %c0_i32_0 = arith.constant 0 : i32
    %c0_i32_1 = arith.constant 0 : i32
    return %c0_i32, %c0_i32_0 : i32, i32
  }
  func.func @transform_2(%arg0: i32) -> (i32, i32) {
    %c0_i32 = arith.constant 0 : i32
    %c0_i32_0 = arith.constant 0 : i32
    %c0_i32_1 = arith.constant 0 : i32
    return %c0_i32, %c0_i32_0 : i32, i32
  }
  func.func @transform_3(%arg0: i32) -> (i32, i32) {
    %c0_i32 = arith.constant 0 : i32
    %c0_i32_0 = arith.constant 0 : i32
    %c0_i32_1 = arith.constant 0 : i32
    return %c0_i32, %c0_i32_0 : i32, i32
  }
  func.func @transform_4(%arg0: i32) -> (i32, i32) {
    %c0_i32 = arith.constant 0 : i32
    %c0_i32_0 = arith.constant 0 : i32
    %c0_i32_1 = arith.constant 0 : i32
    return %c0_i32, %c0_i32_0 : i32, i32
  }
  func.func @transform_5(%arg0: i32) -> (i32, i32) {
    %c0_i32 = arith.constant 0 : i32
    %c0_i32_0 = arith.constant 0 : i32
    return %arg0, %c0_i32 : i32, i32
  }
}

</mosaic_0001>

<llo_original>
// kernel: benson_mlp.1
$region0: #{benson_mlp.1}
  #allocation0 [shape = 'u32[]', space=smem, size = 0x4, offset = 0x4, fixed_abs, tag = 'smem constant byte address 0x4 - core index']
  #allocation1 [shape = 'u32[72,128]{1,0:T(1,128)}', space=vmem, size = 0x9000, scoped, tag = 'internal scratch']
  %s0 = inlined_call_operand.vmem [shape: f32[16,32], index: 0, kind: input, shape index: {}]
  %s1 = inlined_call_operand.vmem [shape: f32[32,128], index: 1, kind: input, shape index: {}]
  %s2 = inlined_call_operand.vmem [shape: f32[1,128], index: 2, kind: input, shape index: {}]
  %s3 = inlined_call_operand.vmem [shape: f32[128,64], index: 3, kind: input, shape index: {}]
  %s4 = inlined_call_operand.vmem [shape: f32[1,64], index: 4, kind: input, shape index: {}]
  %s5 = inlined_call_operand.vmem [shape: f32[16,64], index: 5, kind: output, shape index: {}]
  %s6 = sld [smem:[#allocation0]]
  $region30: #{benson_mlp.1} parent=0
    _
  %s8 = ssub.s32 1, %s6
  %s9 = scalar_select 0, %s8, %s6
  // Predicated region
  $region2: #{benson_mlp.1} parent=0 // pred_check
    _
  $region3: #{benson_mlp.1} parent=0 // pred_check_branch
    %11 = sbr.rel (0) target = $region5
  $region4: #{benson_mlp.1} parent=0 // pred_region
    _
  $region5: #{benson_mlp.1} parent=0 // pred_fallthru
    _
  // Predicated region
  $region6: #{benson_mlp.1} parent=0 // pred_check
    _
  $region7: #{benson_mlp.1} parent=0 // pred_check_branch
    %13 = sbr.rel (0) target = $region9
  $region8: #{benson_mlp.1} parent=0 // pred_region
    _
  $region9: #{benson_mlp.1} parent=0 // pred_fallthru
    _
  // Predicated region
  $region10: #{benson_mlp.1} parent=0 // pred_check
    _
  $region11: #{benson_mlp.1} parent=0 // pred_check_branch
    %15 = sbr.rel (0) target = $region13
  $region12: #{benson_mlp.1} parent=0 // pred_region
    _
  $region13: #{benson_mlp.1} parent=0 // pred_fallthru
    _
  // Predicated region
  $region14: #{benson_mlp.1} parent=0 // pred_check
    _
  $region15: #{benson_mlp.1} parent=0 // pred_check_branch
    %17 = sbr.rel (0) target = $region17
  $region16: #{benson_mlp.1} parent=0 // pred_region
    _
  $region17: #{benson_mlp.1} parent=0 // pred_fallthru
    _
  // Predicated region
  $region18: #{benson_mlp.1} parent=0 // pred_check
    _
  $region19: #{benson_mlp.1} parent=0 // pred_check_branch
    %19 = sbr.rel (0) target = $region21
  $region20: #{benson_mlp.1} parent=0 // pred_region
    _
  $region21: #{benson_mlp.1} parent=0 // pred_fallthru
    _
  %v20 = vld [vmem:[%s0] sm:$0xff]
  %v21 = vld [vmem:[%s0 + $0x8] sm:$0xff]
  %v22 = vld [vmem:[%s1] sm:$0xff]
  %v23 = vld [vmem:[%s1 + $0x8] sm:$0xff]
  %v24 = vld [vmem:[%s1 + $0x10] sm:$0xff]
  %v25 = vld [vmem:[%s1 + $0x18] sm:$0xff]
  %v26 = vld [vmem:[%s2] sm:$0x1]
  %v28 = vperm.slane %v26, 0
  %vm30 = vcmask 261120
  %v32 = vsel %vm30, %v20, 0
  %v35 = vsel %vm30, %v21, 0
  %37 = vmatpush.msra.mxu0 0.0
  %38 = vmatpush.msra.mxu0 0.0
  %39 = vmatpush.msra.mxu0 0.0
  %40 = vmatpush.msra.mxu0 0.0
  %41 = vmatpush.msra.mxu0 0.0
  %42 = vmatpush.msra.mxu0 0.0
  %43 = vmatpush.msra.mxu0 0.0
  %44 = vmatpush.msra.mxu0 0.0
  %45 = vmatpush.msra.mxu0 0.0
  %46 = vmatpush.msra.mxu0 0.0
  %47 = vmatpush.msra.mxu0 0.0
  %48 = vmatpush.msra.mxu0 0.0
  %49 = vmatpush.msra.mxu0 %v25
  %50 = vmatpush.msra.mxu0 %v24
  %51 = vmatpush.msra.mxu0 %v23
  %52 = vmatpush.msra.mxu0 %v22
  %53 = vmatmul.f32.gmra.mxu0 %v32
  %v54 = vpop.f32.mrf.mxu0
  %v55 = vadd.f32 %v28, %v54
  %56 = vmatmul.f32.gmra.mxu0 %v35
  %v57 = vpop.f32.mrf.mxu0
  %v58 = vadd.f32 %v28, %v57
  %59 = vdwg.mxu0
  %v60 = vmax.f32 %v55, 0.0
  %v61 = vmax.f32 %v58, 0.0
  %v62 = vld [vmem:[%s3] sm:$0xff]
  %v63 = vld [vmem:[%s3 + $0x8] sm:$0xff]
  %v64 = vld [vmem:[%s3 + $0x10] sm:$0xff]
  %v65 = vld [vmem:[%s3 + $0x18] sm:$0xff]
  %v66 = vld [vmem:[%s3 + $0x20] sm:$0xff]
  %v67 = vld [vmem:[%s3 + $0x28] sm:$0xff]
  %v68 = vld [vmem:[%s3 + $0x30] sm:$0xff]
  %v69 = vld [vmem:[%s3 + $0x38] sm:$0xff]
  %v70 = vld [vmem:[%s3 + $0x40] sm:$0xff]
  %v71 = vld [vmem:[%s3 + $0x48] sm:$0xff]
  %v72 = vld [vmem:[%s3 + $0x50] sm:$0xff]
  %v73 = vld [vmem:[%s3 + $0x58] sm:$0xff]
  %v74 = vld [vmem:[%s3 + $0x60] sm:$0xff]
  %v75 = vld [vmem:[%s3 + $0x68] sm:$0xff]
  %v76 = vld [vmem:[%s3 + $0x70] sm:$0xff]
  %v77 = vld [vmem:[%s3 + $0x78] sm:$0xff]
  %v78 = vld [vmem:[%s4] sm:$0x1]
  %v80 = vperm.slane %v78, 0
  %82 = vmatpush.msra.mxu0 %v77
  %83 = vmatpush.msra.mxu0 %v76
  %84 = vmatpush.msra.mxu0 %v75
  %85 = vmatpush.msra.mxu0 %v74
  %86 = vmatpush.msra.mxu0 %v73
  %87 = vmatpush.msra.mxu0 %v72
  %88 = vmatpush.msra.mxu0 %v71
  %89 = vmatpush.msra.mxu0 %v70
  %90 = vmatpush.msra.mxu0 %v69
  %91 = vmatpush.msra.mxu0 %v68
  %92 = vmatpush.msra.mxu0 %v67
  %93 = vmatpush.msra.mxu0 %v66
  %94 = vmatpush.msra.mxu0 %v65
  %95 = vmatpush.msra.mxu0 %v64
  %96 = vmatpush.msra.mxu0 %v63
  %97 = vmatpush.msra.mxu0 %v62
  %98 = vmatmul.f32.gmra.mxu0 %v60
  %v99 = vpop.f32.mrf.mxu0
  %v100 = vadd.f32 %v80, %v99
  %101 = vmatmul.f32.gmra.mxu0 %v61
  %v102 = vpop.f32.mrf.mxu0
  %v103 = vadd.f32 %v80, %v102
  %104 = vdwg.mxu0
  %v105 = vmax.f32 %v100, 0.0
  %v106 = vmax.f32 %v103, 0.0
  %vm107 = vcmask 523264
  %108 = vst.msk [vmem:[%s5] sm:$0xff] %vm107, %v105
  %109 = vst.msk [vmem:[%s5 + $0x8] sm:$0xff] %vm107, %v106
  // Predicated region
  $region22: #{benson_mlp.1} parent=0 // pred_check
    _
  $region23: #{benson_mlp.1} parent=0 // pred_check_branch
    %111 = sbr.rel (0) target = $region25
  $region24: #{benson_mlp.1} parent=0 // pred_region
    _
  $region25: #{benson_mlp.1} parent=0 // pred_fallthru
    _
  // Predicated region
  $region26: #{benson_mlp.1} parent=0 // pred_check
    _
  $region27: #{benson_mlp.1} parent=0 // pred_check_branch
    %113 = sbr.rel (0) target = $region29
  $region28: #{benson_mlp.1} parent=0 // pred_region
    _
  $region29: #{benson_mlp.1} parent=0 // pred_fallthru
    _

</llo_original>
